<compile_context>
chip_gen: v6e
topology: v6e:2x2x1
jax: 0.10.0
libtpu: 0.0.40
codegen_flags: <defaults>
</compile_context>

<pallas_src>
import functools

import jax
import jax.numpy as jnp
from jax.experimental import pallas as pl
from jax.experimental.pallas import tpu as pltpu


def _round_up(x, m):
    return -(-x // m) * m


def _tpu_generation():
    """Returns (is_v7x, is_pre_v6) from the device kind string."""
    try:
        kind = jax.devices()[0].device_kind.lower()
    except Exception:  # pragma: no cover - defensive
        kind = ""
    is_v7 = "v7" in kind
    is_pre_v6 = any(t in kind for t in ("v2", "v3", "v4", "v5"))
    return is_v7, is_pre_v6


def bahdanau_kernel(q_ref, items_ref, w_ref, Wt_ref, Ut_ref, v_ref,
                    blend_ref, scores_ref, *, use_bf16_tanh):
    TB, S = w_ref.shape            # S here is the (padded) sequence length
    I = items_ref.shape[-1]
    A = Wt_ref.shape[-1]

    q = q_ref[...]                 # (TB, Q)    f32
    items = items_ref[...]         # (TB*S, I)  f32 (kept f32 for the blended reduce)
    wts = w_ref[...]               # (TB, S)    f32 mask, lane-dense

    # Projections on the MXU at native bf16 rate, f32 accumulate.
    pq = jnp.dot(q.astype(jnp.bfloat16), Wt_ref[...],
                 preferred_element_type=jnp.float32)               # (TB, A)
    pi = jnp.dot(items.astype(jnp.bfloat16), Ut_ref[...],
                 preferred_element_type=jnp.float32)               # (TB*S, A)
    pi = pi.reshape(TB, S, A)      # S padded to x8 -> sublane-tile aligned split

    pre = pq[:, None, :] + pi                                      # (TB, S, A) f32
    if use_bf16_tanh:
        # v6e/v7x: bf16 EUP path packs 2 elems/lane -> half the tanh vreg count.
        added = jnp.tanh(pre.astype(jnp.bfloat16))                 # (TB, S, A) bf16
        prod = added * v_ref[...].astype(jnp.bfloat16)[None, :, :]
    else:
        added = jnp.tanh(pre)
        prod = added * v_ref[...][None, :, :]
    # v-projection as VPU multiply + lane reduce (avoids an N=1 MXU matmul);
    # accumulate the reduce in f32.
    react = jnp.sum(prod.astype(jnp.float32), axis=-1)             # (TB, S)

    # masked_fill(weights == 0, -inf) -- large finite negative so fully-masked
    # rows (incl. padding) give uniform scores instead of NaN; exp underflows
    # to exactly 0 for masked positions.
    react = jnp.where(wts == 0.0, -1e30, react)

    # Softmax over the (lane-dense) sequence axis.
    m = jnp.max(react, axis=-1, keepdims=True)                     # (TB, 1)
    e = jnp.exp(react - m)                                         # (TB, S)
    denom = jnp.sum(e, axis=-1, keepdims=True)                     # (TB, 1)
    inv = pl.reciprocal(denom, approx=True)                        # EUP
    inv = inv * (2.0 - denom * inv)                                # Newton -> ~f32
    scores = e * inv                                               # (TB, S)

    scores_ref[...] = scores
    # blended = sum_s scores[b, s] * items[b, s, :] (f32 broadcast-mul + reduce)
    blend_ref[...] = jnp.sum(scores[:, :, None] * items.reshape(TB, S, I), axis=1)


def _choose_batch_tile(B, S, I, A, Q, *, is_v7):
    # vreg-pressure cap: keep the (tb*S, A)/(tb, S, I) f32 intermediates ~<=128 KiB.
    tb_vreg = max(1, (128 * 1024) // max(S * max(A, I) * 4, 1))
    # VMEM cap: double-buffered f32 items tile + pi/added intermediates + outputs,
    # with headroom under 64 MiB physical (v7x) / 128 MiB (v5e/v6e).
    vmem_budget = (24 << 20) if is_v7 else (56 << 20)
    per_row = S * (3 * I + 4 * A + 4) * 4 + (Q + I) * 4
    tb_vmem = max(1, vmem_budget // max(per_row, 1))

    tb = max(1, min(B, tb_vreg, tb_vmem))
    # v7x has 2 TensorCores: aim for >=4 grid steps (>=2 per core) when the
    # batch is big enough to be worth splitting.  v5e/v6e are single-TC: the
    # grid is a serial loop, so fewer, bigger steps win.
    if is_v7 and B >= 32:
        tb = min(tb, max(8, B // 4))
    if tb >= B:
        return B                        # single step: block shapes == full extents
    return max(8, (tb // 8) * 8)        # multi-step: sublane-aligned batch tile


def bahdanau_attention(queries, multiple_items, weights, Wt, Ut, v_row, *, tb=None):
    B = queries.shape[0]
    Q = queries.shape[-1]
    _, S, I = multiple_items.shape
    A = Wt.shape[-1]

    is_v7, is_pre_v6 = _tpu_generation()
    use_bf16_tanh = not is_pre_v6       # bf16 EUP/VPU path only on v6e/v7x

    # Pad the sequence axis to a multiple of 8 so the in-kernel
    # (tb*S, .) -> (tb, S, .) split is tile aligned; padded positions have
    # weight 0 (zero attention) and zero items (zero blended contribution).
    Sp = _round_up(S, 8)
    if Sp != S:
        multiple_items = jnp.pad(multiple_items, ((0, 0), (0, Sp - S), (0, 0)))
        weights = jnp.pad(weights, ((0, 0), (0, Sp - S)))

    if tb is None:
        tb = _choose_batch_tile(B, Sp, I, A, Q, is_v7=is_v7)

    queries2 = queries.reshape(B, Q)    # free metadata reshape (drops singleton)

    # Pad batch to a multiple of the tile; padded rows are fully masked and
    # sliced off afterwards.
    Bp = _round_up(B, tb)
    if Bp != B:
        pad = Bp - B
        queries2 = jnp.pad(queries2, ((0, pad), (0, 0)))
        multiple_items = jnp.pad(multiple_items, ((0, pad), (0, 0), (0, 0)))
        weights = jnp.pad(weights, ((0, pad), (0, 0)))

    items_flat = multiple_items.reshape(Bp * Sp, I)   # free metadata reshape

    Wt_b = Wt.astype(jnp.bfloat16)      # resident bf16 MXU weights
    Ut_b = Ut.astype(jnp.bfloat16)

    kernel = functools.partial(bahdanau_kernel, use_bf16_tanh=use_bf16_tanh)

    blended, scores = pl.pallas_call(
        kernel,
        out_shape=(
            jax.ShapeDtypeStruct((Bp, I), jnp.float32),    # blended (lane-dense)
            jax.ShapeDtypeStruct((Bp, Sp), jnp.float32),   # scores  (lane-dense)
        ),
        grid_spec=pl.GridSpec(
            grid=(Bp // tb,),
            in_specs=[
                pl.BlockSpec((tb, Q), lambda b: (b, 0)),         # queries
                pl.BlockSpec((tb * Sp, I), lambda b: (b, 0)),    # items (pre-flattened)
                pl.BlockSpec((tb, Sp), lambda b: (b, 0)),        # mask
                pl.BlockSpec((Q, A), lambda b: (0, 0)),          # W^T (resident, bf16)
                pl.BlockSpec((I, A), lambda b: (0, 0)),          # U^T (resident, bf16)
                pl.BlockSpec((1, A), lambda b: (0, 0)),          # v row (resident, f32)
            ],
            out_specs=[
                pl.BlockSpec((tb, I), lambda b: (b, 0)),         # blended
                pl.BlockSpec((tb, Sp), lambda b: (b, 0)),        # scores
            ],
        ),
        compiler_params=pltpu.CompilerParams(
            dimension_semantics=("parallel",),
            vmem_limit_bytes=(48 << 20) if is_v7 else (96 << 20),
        ),
    )(queries2, items_flat, weights, Wt_b, Ut_b, v_row)

    return blended[:B], scores[:B, :S]


def reference(queries, multiple_items, weights, Wt, Ut, v_row):
    pq = queries @ Wt                                    # (B, 1, A)
    pi = multiple_items @ Ut                             # (B, S, A)
    added = jnp.tanh(pq + pi)                            # (B, S, A)
    react = jnp.einsum("bsa,a->bs", added, v_row[0])     # (B, S)
    react = jnp.where(weights == 0.0, -jnp.inf, react)
    scores = jax.nn.softmax(react, axis=1)               # (B, S)
    blended = jnp.einsum("bs,bsd->bd", scores, multiple_items)
    return blended, scores


if __name__ == "__main__":
    B, S = 2, 8
    query_dim, item_dim, attention_dim = 16, 16, 32

    key = jax.random.PRNGKey(0)
    kq, ki, kw, ku, kv = jax.random.split(key, 5)

    queries = jax.random.normal(kq, (B, 1, query_dim), dtype=jnp.float32)
    multiple_items = jax.random.normal(ki, (B, S, item_dim), dtype=jnp.float32)

    # mask: 1 = keep, 0 = masked out (batch 0 masks its last two positions)
    weights = jnp.ones((B, S), dtype=jnp.float32)
    weights = weights.at[0, -2:].set(0.0)

    # deterministic "Linear" parameters (W/U stored transposed vs torch layout,
    # v stored as its natural (1, A) row)
    Wt = 0.1 * jax.random.normal(kw, (query_dim, attention_dim), dtype=jnp.float32)
    Ut = 0.1 * jax.random.normal(ku, (item_dim, attention_dim), dtype=jnp.float32)
    v_row = 0.1 * jax.random.normal(kv, (1, attention_dim), dtype=jnp.float32)

    blended, scores = bahdanau_attention(queries, multiple_items, weights,
                                         Wt, Ut, v_row)
    jax.block_until_ready((blended, scores))

    blended_ref, scores_ref = reference(queries, multiple_items, weights,
                                        Wt, Ut, v_row)

    # Tolerance relaxed vs the pure-f32 version: the projections (and, on
    # v6e/v7x, the tanh) run in bf16 with f32 accumulation.
    assert jnp.allclose(blended, blended_ref, atol=5e-2, rtol=5e-2), "blended mismatch"
    assert jnp.allclose(scores, scores_ref, atol=5e-2, rtol=5e-2), "scores mismatch"
    # masked positions must receive exactly zero attention
    assert float(scores[0, -1]) == 0.0 and float(scores[0, -2]) == 0.0

    print("KERNEL_OK")
</pallas_src>

<mosaic_0001>
module attributes {stable_mosaic.version = 11 : i64} {
  func.func @bahdanau_kernel(%arg0: i32, %arg1: memref<2x16xf32, #tpu.memory_space<vmem>>, %arg2: memref<16x16xf32, #tpu.memory_space<vmem>>, %arg3: memref<2x8xf32, #tpu.memory_space<vmem>>, %arg4: memref<16x32xbf16, #tpu.memory_space<vmem>>, %arg5: memref<16x32xbf16, #tpu.memory_space<vmem>>, %arg6: memref<1x32xf32, #tpu.memory_space<vmem>>, %arg7: memref<2x16xf32, #tpu.memory_space<vmem>>, %arg8: memref<2x8xf32, #tpu.memory_space<vmem>>) attributes {dimension_semantics = [#tpu.dimension_semantics<parallel>], iteration_bounds = array<i64: 1>, scalar_prefetch = 0 : i64, scratch_operands = 0 : i64, tpu.core_type = #tpu.core_type<tc>, window_params = [{transform_indices = @transform_0, window_bounds = array<i64: 2, 16>}, {transform_indices = @transform_1, window_bounds = array<i64: 16, 16>}, {transform_indices = @transform_2, window_bounds = array<i64: 2, 8>}, {pipeline_mode = #tpu.pipeline_mode<synchronous>, transform_indices = @transform_3, window_bounds = array<i64: 16, 32>}, {pipeline_mode = #tpu.pipeline_mode<synchronous>, transform_indices = @transform_4, window_bounds = array<i64: 16, 32>}, {pipeline_mode = #tpu.pipeline_mode<synchronous>, transform_indices = @transform_5, window_bounds = array<i64: 1, 32>}, {transform_indices = @transform_6, window_bounds = array<i64: 2, 16>}, {transform_indices = @transform_7, window_bounds = array<i64: 2, 8>}]} {
    %c0 = arith.constant 0 : index
    %c0_0 = arith.constant 0 : index
    %0 = vector.load %arg1[%c0, %c0_0] : memref<2x16xf32, #tpu.memory_space<vmem>>, vector<2x16xf32>
    %c0_1 = arith.constant 0 : index
    %c0_2 = arith.constant 0 : index
    %1 = vector.load %arg2[%c0_1, %c0_2] : memref<16x16xf32, #tpu.memory_space<vmem>>, vector<16x16xf32>
    %c0_3 = arith.constant 0 : index
    %c0_4 = arith.constant 0 : index
    %2 = vector.load %arg3[%c0_3, %c0_4] : memref<2x8xf32, #tpu.memory_space<vmem>>, vector<2x8xf32>
    %3 = arith.truncf %0 : vector<2x16xf32> to vector<2x16xbf16>
    %c0_5 = arith.constant 0 : index
    %c0_6 = arith.constant 0 : index
    %4 = vector.load %arg4[%c0_5, %c0_6] : memref<16x32xbf16, #tpu.memory_space<vmem>>, vector<16x32xbf16>
    %cst = arith.constant dense<0.000000e+00> : vector<2x32xf32>
    %5 = tpu.matmul %3, %4, %cst {dimension_numbers = #tpu.dot_dimension_numbers<[1], [0], [0], [1], [0, 0, 1, 1], [], []>} : vector<2x16xbf16>, vector<16x32xbf16>, vector<2x32xf32> -> vector<2x32xf32>
    %6 = arith.truncf %1 : vector<16x16xf32> to vector<16x16xbf16>
    %c0_7 = arith.constant 0 : index
    %c0_8 = arith.constant 0 : index
    %7 = vector.load %arg5[%c0_7, %c0_8] : memref<16x32xbf16, #tpu.memory_space<vmem>>, vector<16x32xbf16>
    %cst_9 = arith.constant dense<0.000000e+00> : vector<16x32xf32>
    %8 = tpu.matmul %6, %7, %cst_9 {dimension_numbers = #tpu.dot_dimension_numbers<[1], [0], [0], [1], [0, 0, 1, 1], [], []>} : vector<16x16xbf16>, vector<16x32xbf16>, vector<16x32xf32> -> vector<16x32xf32>
    %9 = vector.shape_cast %8 : vector<16x32xf32> to vector<2x8x32xf32>
    %10 = vector.shape_cast %5 : vector<2x32xf32> to vector<2x1x32xf32>
    %11 = vector.broadcast %10 : vector<2x1x32xf32> to vector<2x8x32xf32>
    %12 = arith.addf %11, %9 : vector<2x8x32xf32>
    %13 = arith.truncf %12 : vector<2x8x32xf32> to vector<2x8x32xbf16>
    %14 = math.tanh %13 : vector<2x8x32xbf16>
    %c0_10 = arith.constant 0 : index
    %c0_11 = arith.constant 0 : index
    %15 = vector.load %arg6[%c0_10, %c0_11] : memref<1x32xf32, #tpu.memory_space<vmem>>, vector<1x32xf32>
    %16 = arith.truncf %15 : vector<1x32xf32> to vector<1x32xbf16>
    %17 = vector.shape_cast %16 : vector<1x32xbf16> to vector<1x1x32xbf16>
    %18 = vector.broadcast %17 : vector<1x1x32xbf16> to vector<2x8x32xbf16>
    %19 = arith.mulf %14, %18 : vector<2x8x32xbf16>
    %20 = arith.extf %19 : vector<2x8x32xbf16> to vector<2x8x32xf32>
    %cst_12 = arith.constant dense<0.000000e+00> : vector<2x8xf32>
    %21 = vector.multi_reduction <add>, %20, %cst_12 [2] : vector<2x8x32xf32> to vector<2x8xf32>
    %cst_13 = arith.constant 0.000000e+00 : f32
    %22 = vector.broadcast %cst_13 : f32 to vector<2x8xf32>
    %23 = arith.cmpf oeq, %2, %22 : vector<2x8xf32>
    %cst_14 = arith.constant -1.000000e+30 : f32
    %24 = vector.broadcast %cst_14 : f32 to vector<2x8xf32>
    %25 = arith.select %23, %24, %21 : vector<2x8xi1>, vector<2x8xf32>
    %cst_15 = arith.constant dense<0xFF800000> : vector<2xf32>
    %26 = vector.multi_reduction <maximumf>, %25, %cst_15 [1] : vector<2x8xf32> to vector<2xf32>
    %27 = vector.shape_cast %26 : vector<2xf32> to vector<2x1xf32>
    %28 = vector.broadcast %27 : vector<2x1xf32> to vector<2x8xf32>
    %29 = arith.subf %25, %28 : vector<2x8xf32>
    %30 = math.exp %29 : vector<2x8xf32>
    %cst_16 = arith.constant dense<0.000000e+00> : vector<2xf32>
    %31 = vector.multi_reduction <add>, %30, %cst_16 [1] : vector<2x8xf32> to vector<2xf32>
    %32 = vector.shape_cast %31 : vector<2xf32> to vector<2x1xf32>
    %33 = tpu.reciprocal %32 {approx = true} : vector<2x1xf32> -> vector<2x1xf32>
    %34 = arith.mulf %32, %33 : vector<2x1xf32>
    %cst_17 = arith.constant 2.000000e+00 : f32
    %35 = vector.broadcast %cst_17 : f32 to vector<2x1xf32>
    %36 = arith.subf %35, %34 : vector<2x1xf32>
    %37 = arith.mulf %33, %36 : vector<2x1xf32>
    %38 = vector.broadcast %37 : vector<2x1xf32> to vector<2x8xf32>
    %39 = arith.mulf %30, %38 : vector<2x8xf32>
    %c0_18 = arith.constant 0 : index
    %c0_19 = arith.constant 0 : index
    %40 = vector.load %arg8[%c0_18, %c0_19] : memref<2x8xf32, #tpu.memory_space<vmem>>, vector<2x8xf32>
    tpu.vector_store %arg8[%c0_18, %c0_19], %39 {strides = array<i32>} : memref<2x8xf32, #tpu.memory_space<vmem>>, vector<2x8xf32>,
    %41 = vector.shape_cast %39 : vector<2x8xf32> to vector<2x8x1xf32>
    %42 = vector.shape_cast %1 : vector<16x16xf32> to vector<2x8x16xf32>
    %43 = vector.broadcast %41 : vector<2x8x1xf32> to vector<2x8x16xf32>
    %44 = arith.mulf %43, %42 : vector<2x8x16xf32>
    %cst_20 = arith.constant dense<0.000000e+00> : vector<2x16xf32>
    %45 = vector.multi_reduction <add>, %44, %cst_20 [1] : vector<2x8x16xf32> to vector<2x16xf32>
    %c0_21 = arith.constant 0 : index
    %c0_22 = arith.constant 0 : index
    %46 = vector.load %arg7[%c0_21, %c0_22] : memref<2x16xf32, #tpu.memory_space<vmem>>, vector<2x16xf32>
    tpu.vector_store %arg7[%c0_21, %c0_22], %45 {strides = array<i32>} : memref<2x16xf32, #tpu.memory_space<vmem>>, vector<2x16xf32>,
    return
  }
  func.func @transform_0(%arg0: i32) -> (i32, i32) {
    %c0_i32 = arith.constant 0 : i32
    %c0_i32_0 = arith.constant 0 : i32
    return %arg0, %c0_i32 : i32, i32
  }
  func.func @transform_1(%arg0: i32) -> (i32, i32) {
    %c0_i32 = arith.constant 0 : i32
    %c0_i32_0 = arith.constant 0 : i32
    return %arg0, %c0_i32 : i32, i32
  }
  func.func @transform_2(%arg0: i32) -> (i32, i32) {
    %c0_i32 = arith.constant 0 : i32
    %c0_i32_0 = arith.constant 0 : i32
    return %arg0, %c0_i32 : i32, i32
  }
  func.func @transform_3(%arg0: i32) -> (i32, i32) {
    %c0_i32 = arith.constant 0 : i32
    %c0_i32_0 = arith.constant 0 : i32
    %c0_i32_1 = arith.constant 0 : i32
    return %c0_i32, %c0_i32_0 : i32, i32
  }
  func.func @transform_4(%arg0: i32) -> (i32, i32) {
    %c0_i32 = arith.constant 0 : i32
    %c0_i32_0 = arith.constant 0 : i32
    %c0_i32_1 = arith.constant 0 : i32
    return %c0_i32, %c0_i32_0 : i32, i32
  }
  func.func @transform_5(%arg0: i32) -> (i32, i32) {
    %c0_i32 = arith.constant 0 : i32
    %c0_i32_0 = arith.constant 0 : i32
    %c0_i32_1 = arith.constant 0 : i32
    return %c0_i32, %c0_i32_0 : i32, i32
  }
  func.func @transform_6(%arg0: i32) -> (i32, i32) {
    %c0_i32 = arith.constant 0 : i32
    %c0_i32_0 = arith.constant 0 : i32
    return %arg0, %c0_i32 : i32, i32
  }
  func.func @transform_7(%arg0: i32) -> (i32, i32) {
    %c0_i32 = arith.constant 0 : i32
    %c0_i32_0 = arith.constant 0 : i32
    return %arg0, %c0_i32 : i32, i32
  }
}

</mosaic_0001>

<llo_original>
// kernel: tpu_custom_call.1
$region0: #{tpu_custom_call.1}
  #allocation0 [shape = 'u32[]', space=smem, size = 0x4, offset = 0x4, fixed_abs, tag = 'smem constant byte address 0x4 - core index']
  #allocation1 [shape = 'u32[144,128]{1,0:T(1,128)}', space=vmem, size = 0x12000, scoped, tag = 'internal scratch']
  %s0 = inlined_call_operand.hbm [shape: f32[2,16], index: 0, kind: input, shape index: {}]
  %s1 = inlined_call_operand.hbm [shape: f32[16,16], index: 1, kind: input, shape index: {}]
  %s2 = inlined_call_operand.vmem [shape: f32[2,8], index: 2, kind: input, shape index: {}]
  %s3 = inlined_call_operand.hbm [shape: bf16[16,32], index: 3, kind: input, shape index: {}]
  %s4 = inlined_call_operand.hbm [shape: bf16[16,32], index: 4, kind: input, shape index: {}]
  %s5 = inlined_call_operand.vmem [shape: f32[1,32], index: 5, kind: input, shape index: {}]
  %s6 = inlined_call_operand.hbm [shape: f32[2,16], index: 6, kind: output, shape index: {0}]
  %s7 = inlined_call_operand.hbm [shape: f32[2,8], index: 7, kind: output, shape index: {1}]
  %8 = xla_tuple %s6, %s7
  %s9 = sld [smem:[#allocation0]]
  $region58: #{tpu_custom_call.1} parent=0
    _
  %s11 = ssub.s32 1, %s9
  %s12 = scalar_select 0, %s11, %s9
  $region1: #{tpu_custom_call.1} parent=0
    #allocation2 [shape = 'u8[1024]{0}', space=vmem, size = 0x400, scoped, tag = 'input window, operand 0, single buffered']
    #allocation3 [shape = 's32[1]{0}', space=sflag, size = 0x4, scoped, tag = 'scoped memory for tpu_custom_call.1']
    #allocation4 [shape = 's32[1]{0}', space=sflag, size = 0x4, scoped, tag = 'scoped memory for tpu_custom_call.1']
    #allocation5 [shape = 'u8[8192]{0}', space=vmem, size = 0x2000, scoped, tag = 'input window, operand 1, single buffered']
    #allocation6 [shape = 's32[1]{0}', space=sflag, size = 0x4, scoped, tag = 'scoped memory for tpu_custom_call.1']
    #allocation7 [shape = 'u8[4096]{0}', space=vmem, size = 0x1000, scoped, tag = 'input window, operand 3, single buffered']
    #allocation8 [shape = 'u8[4096]{0}', space=vmem, size = 0x1000, scoped, tag = 'input window, operand 4, single buffered']
    #allocation9 [shape = 's32[1]{0}', space=sflag, size = 0x4, scoped, tag = 'scoped memory for tpu_custom_call.1']
    #allocation10 [shape = 'u8[1024]{0}', space=vmem, size = 0x400, scoped, tag = 'output window, operand 0, single buffered']
    #allocation11 [shape = 'u8[1024]{0}', space=vmem, size = 0x400, scoped, tag = 'output window, operand 1, single buffered']
    #allocation12 [shape = 's32[1]{0}', space=sflag, size = 0x4, scoped, tag = 'scoped memory for tpu_custom_call.1']
    %13 = vsyncpa [#allocation3], 0
    %14 = vsyncpa [#allocation6], 0
    %15 = vsyncpa [#allocation9], 0
    %16 = vsyncpa [#allocation4], 0
    %17 = vsyncpa [#allocation12], 0
    // Predicated region
    $region2: #{tpu_custom_call.1} parent=1 // pred_check
      _
    $region3: #{tpu_custom_call.1} parent=1 // pred_check_branch
      %19 = sbr.rel (0) target = $region5
    $region4: #{tpu_custom_call.1} parent=1 // pred_region
      %s21 = ssub.s32 32, 32
      %22 = vsyncadd [#allocation3], %s21
      %s24 = sshll.u32 [#allocation2], 4
      %s25 = int_to_ptr.vmem [resolvable:$true] %s24
      %27 = dma.hbm_to_vmem [thread:$0]  %s0, 32, %s25, [#allocation3]
    $region5: #{tpu_custom_call.1} parent=1 // pred_fallthru
      _
    // Predicated region
    $region6: #{tpu_custom_call.1} parent=1 // pred_check
      _
    $region7: #{tpu_custom_call.1} parent=1 // pred_check_branch
      %29 = sbr.rel (0) target = $region9
    $region8: #{tpu_custom_call.1} parent=1 // pred_region
      %s31 = ssub.s32 256, 256
      %32 = vsyncadd [#allocation6], %s31
      %s33 = sshll.u32 [#allocation5], 4
      %s34 = int_to_ptr.vmem [resolvable:$true] %s33
      %39 = dma.hbm_to_vmem [thread:$0]  %s1, 256, %s34, [#allocation6], 128, 128, 8
    $region9: #{tpu_custom_call.1} parent=1 // pred_fallthru
      _
    // Predicated region
    $region10: #{tpu_custom_call.1} parent=1 // pred_check
      _
    $region11: #{tpu_custom_call.1} parent=1 // pred_check_branch
      %41 = sbr.rel (0) target = $region13
    $region12: #{tpu_custom_call.1} parent=1 // pred_region
      _
    $region13: #{tpu_custom_call.1} parent=1 // pred_fallthru
      _
    // Predicated region
    $region14: #{tpu_custom_call.1} parent=1 // pred_check
      _
    $region15: #{tpu_custom_call.1} parent=1 // pred_check_branch
      %43 = sbr.rel (0) target = $region17
    $region16: #{tpu_custom_call.1} parent=1 // pred_region
      %s45 = ssub.s32 128, 128
      %46 = vsyncadd [#allocation6], %s45
      %s47 = sshll.u32 [#allocation7], 4
      %s48 = int_to_ptr.vmem [resolvable:$true] %s47
      %53 = dma.hbm_to_vmem [thread:$0]  %s3, 128, %s48, [#allocation6], 64, 64, 4
    $region17: #{tpu_custom_call.1} parent=1 // pred_fallthru
      _
    // Predicated region
    $region18: #{tpu_custom_call.1} parent=1 // pred_check
      _
    $region19: #{tpu_custom_call.1} parent=1 // pred_check_branch
      %55 = sbr.rel (0) target = $region21
    $region20: #{tpu_custom_call.1} parent=1 // pred_region
      %s57 = ssub.s32 128, 128
      %58 = vsyncadd [#allocation9], %s57
      %s59 = sshll.u32 [#allocation8], 4
      %s60 = int_to_ptr.vmem [resolvable:$true] %s59
      %65 = dma.hbm_to_vmem [thread:$0]  %s4, 128, %s60, [#allocation9], 64, 64, 4
    $region21: #{tpu_custom_call.1} parent=1 // pred_fallthru
      _
    // Predicated region
    $region22: #{tpu_custom_call.1} parent=1 // pred_check
      _
    $region23: #{tpu_custom_call.1} parent=1 // pred_check_branch
      %67 = sbr.rel (0) target = $region25
    $region24: #{tpu_custom_call.1} parent=1 // pred_region
      _
    $region25: #{tpu_custom_call.1} parent=1 // pred_fallthru
      _
    // Predicated region
    $region26: #{tpu_custom_call.1} parent=1 // pred_check
      _
    $region27: #{tpu_custom_call.1} parent=1 // pred_check_branch
      %69 = sbr.rel (0) target = $region29
    $region28: #{tpu_custom_call.1} parent=1 // pred_region
      %70 = dma.done [#allocation3], 32
    $region29: #{tpu_custom_call.1} parent=1 // pred_fallthru
      _
    // Predicated region
    $region30: #{tpu_custom_call.1} parent=1 // pred_check
      _
    $region31: #{tpu_custom_call.1} parent=1 // pred_check_branch
      %72 = sbr.rel (0) target = $region33
    $region32: #{tpu_custom_call.1} parent=1 // pred_region
      %73 = dma.done [#allocation6], 256
    $region33: #{tpu_custom_call.1} parent=1 // pred_fallthru
      _
    // Predicated region
    $region34: #{tpu_custom_call.1} parent=1 // pred_check
      _
    $region35: #{tpu_custom_call.1} parent=1 // pred_check_branch
      %75 = sbr.rel (0) target = $region37
    $region36: #{tpu_custom_call.1} parent=1 // pred_region
      %76 = dma.done [#allocation6], 128
    $region37: #{tpu_custom_call.1} parent=1 // pred_fallthru
      _
    // Predicated region
    $region38: #{tpu_custom_call.1} parent=1 // pred_check
      _
    $region39: #{tpu_custom_call.1} parent=1 // pred_check_branch
      %78 = sbr.rel (0) target = $region41
    $region40: #{tpu_custom_call.1} parent=1 // pred_region
      %79 = dma.done [#allocation9], 128
    $region41: #{tpu_custom_call.1} parent=1 // pred_fallthru
      _
    %v81 = vld [vmem:[#allocation2] sm:$0x3]
    %v82 = vld [vmem:[#allocation5] sm:$0xff]
    %v83 = vld [vmem:[#allocation5 + $0x8] sm:$0xff]
    %v84 = vld [vmem:[%s2] sm:$0x3]
    %v85 = vpack.c.bf16 %v81, %v81
    %v86 = vld [vmem:[#allocation7] sm:$0xf]
    %v87 = vld [vmem:[#allocation7 + $0x4] sm:$0xf]
    %v90 = vunpack.c.l.b16 %v86
    %v91 = vunpack.c.l.b16 %v87
    %v92 = vpack.c.b16 %v91, %v90
    %vm94 = vcmask 130048
    %v96 = vsel %vm94, %v85, 0
    %98 = vmatprep.subr.bf16.mxu0 0
    %99 = vmatpush1.bf16.msra.mxu0 0
    %100 = vmatprep.subr.bf16.mxu0 0
    %101 = vmatpush1.bf16.msra.mxu0 0
    %102 = vmatprep.subr.bf16.mxu0 0
    %103 = vmatpush1.bf16.msra.mxu0 0
    %104 = vmatprep.subr.bf16.mxu0 0
    %105 = vmatpush1.bf16.msra.mxu0 0
    %106 = vmatprep.subr.bf16.mxu0 0
    %107 = vmatpush1.bf16.msra.mxu0 0
    %108 = vmatprep.subr.bf16.mxu0 0
    %109 = vmatpush1.bf16.msra.mxu0 0
    %110 = vmatprep.subr.bf16.mxu0 0
    %111 = vmatpush1.bf16.msra.mxu0 0
    %112 = vmatprep.subr.bf16.mxu0 0
    %113 = vmatpush1.bf16.msra.mxu0 %v92
    %114 = vmatprep.subr.bf16.mxu0 0
    %115 = vmatpush2.bf16.msra.mxu0 0
    %116 = vmatprep.subr.bf16.mxu0 0
    %117 = vmatpush2.bf16.msra.mxu0 0
    %118 = vmatprep.subr.bf16.mxu0 0
    %119 = vmatpush2.bf16.msra.mxu0 0
    %120 = vmatprep.subr.bf16.mxu0 0
    %121 = vmatpush2.bf16.msra.mxu0 0
    %122 = vmatprep.subr.bf16.mxu0 0
    %123 = vmatpush2.bf16.msra.mxu0 0
    %124 = vmatprep.subr.bf16.mxu0 0
    %125 = vmatpush2.bf16.msra.mxu0 0
    %126 = vmatprep.subr.bf16.mxu0 0
    %127 = vmatpush2.bf16.msra.mxu0 0
    %128 = vmatprep.subr.bf16.mxu0 0
    %129 = vmatpush2.bf16.msra.mxu0 0
    %130 = vmatprep.mubr.bf16.mxu0 0
    %131 = vmatmul.mubr.bf16.gmra.mxu0 %v96
    %v132 = vpop.f32.mrf.mxu0
    %v133 = vadd.f32 0.0, %v132
    %v134 = vpop.f32.mrf.mxu0
    %v135 = vpop.f32.mrf.mxu0
    %v136 = vpop.f32.mrf.mxu0
    %137 = vdwg.mxu0
    %v138 = vpack.c.bf16 %v83, %v82
    %v139 = vld [vmem:[#allocation8] sm:$0xf]
    %v140 = vld [vmem:[#allocation8 + $0x4] sm:$0xf]
    %v143 = vunpack.c.l.b16 %v139
    %v144 = vunpack.c.l.b16 %v140
    %v145 = vpack.c.b16 %v144, %v143
    %v148 = vsel %vm94, %v138, 0
    %150 = vmatprep.subr.bf16.mxu0 0
    %151 = vmatpush1.bf16.msra.mxu0 0
    %152 = vmatprep.subr.bf16.mxu0 0
    %153 = vmatpush1.bf16.msra.mxu0 0
    %154 = vmatprep.subr.bf16.mxu0 0
    %155 = vmatpush1.bf16.msra.mxu0 0
    %156 = vmatprep.subr.bf16.mxu0 0
    %157 = vmatpush1.bf16.msra.mxu0 0
    %158 = vmatprep.subr.bf16.mxu0 0
    %159 = vmatpush1.bf16.msra.mxu0 0
    %160 = vmatprep.subr.bf16.mxu0 0
    %161 = vmatpush1.bf16.msra.mxu0 0
    %162 = vmatprep.subr.bf16.mxu0 0
    %163 = vmatpush1.bf16.msra.mxu0 0
    %164 = vmatprep.subr.bf16.mxu0 0
    %165 = vmatpush1.bf16.msra.mxu0 %v145
    %166 = vmatprep.subr.bf16.mxu0 0
    %167 = vmatpush2.bf16.msra.mxu0 0
    %168 = vmatprep.subr.bf16.mxu0 0
    %169 = vmatpush2.bf16.msra.mxu0 0
    %170 = vmatprep.subr.bf16.mxu0 0
    %171 = vmatpush2.bf16.msra.mxu0 0
    %172 = vmatprep.subr.bf16.mxu0 0
    %173 = vmatpush2.bf16.msra.mxu0 0
    %174 = vmatprep.subr.bf16.mxu0 0
    %175 = vmatpush2.bf16.msra.mxu0 0
    %176 = vmatprep.subr.bf16.mxu0 0
    %177 = vmatpush2.bf16.msra.mxu0 0
    %178 = vmatprep.subr.bf16.mxu0 0
    %179 = vmatpush2.bf16.msra.mxu0 0
    %180 = vmatprep.subr.bf16.mxu0 0
    %181 = vmatpush2.bf16.msra.mxu0 0
    %182 = vmatprep.mubr.bf16.mxu0 0
    %183 = vmatmul.mubr.bf16.gmra.mxu0 %v148
    %v184 = vpop.f32.mrf.mxu0
    %v185 = vadd.f32 0.0, %v184
    %v186 = vpop.f32.mrf.mxu0
    %v187 = vpop.f32.mrf.mxu0
    %v188 = vadd.f32 0.0, %v187
    %v189 = vpop.f32.mrf.mxu0
    %190 = vdwg.mxu0
    %v193 = vunpack.c.l.s4 1966171168
    %v194 = vunpack.c.0.s8 %v193
    %v195 = vlaneseq
    %v196 = vshrl.u32 %v195, 7
    %v197 = vsub.s32 %v194, %v196
    %v198 = vrot.slane %v133, %v197
    %v199 = vcombine.high %v198, %v198
    %v201 = vunpack.c.l.s4 1966171168
    %v202 = vunpack.c.0.s8 %v201
    %v203 = vlaneseq
    %v204 = vshrl.u32 %v203, 7
    %v205 = vsub.s32 %v202, %v204
    %v206 = vrot.slane %v198, %v205
    %v208 = vunpack.c.l.s4 1966171168
    %v209 = vunpack.c.0.s8 %v208
    %v210 = vlaneseq
    %v211 = vshrl.u32 %v210, 7
    %v212 = vsub.s32 %v209, %v211
    %v213 = vrot.slane %v199, %v212
    %v214 = vlaneseq
    %v215 = vshrl.u32 %v214, 7
    %v216 = vsub.s32 0, %v215
    %v217 = vrot.slane %v206, %v216
    %v218 = vlaneseq
    %v219 = vshrl.u32 %v218, 7
    %v220 = vsub.s32 0, %v219
    %v221 = vrot.slane %v213, %v220
    %v224 = vadd.f32 %v217, %v185
    %v225 = vadd.f32 %v221, %v188
    %v226 = vpack.c.bf16 %v224, %v224
    %v227 = vpack.c.bf16 %v225, %v225
    %v228 = vtanh.bf16.pop %v226
    %v229 = vtanh.bf16.pop %v227
    %v230 = vld [vmem:[%s5] sm:$0x1]
    %v231 = vpack.c.bf16 %v230, %v230
    %v233 = vpack.i.b16 %v231, %v231
    %v235 = vlaneseq
    %v236 = vshrl.u32 %v235, 7
    %v237 = vsub.s32 0, %v236
    %v238 = vrot.slane %v233, %v237
    %v239 = vmul.bf16 %v228, %v238
    %v240 = vmul.bf16 %v229, %v238
    %v241 = vunpack.c.l.bf16 %v239
    %v242 = vunpack.c.l.bf16 %v240
    %vm243 = vcmask 261120
    %v244 = vsel %vm243, %v241, 0.0
    %245 = vadd.xlane.f32.xlu0 %v244
    %v246 = vpop.xlane.xlu0 %245
    %v247 = vsel %vm243, %v242, 0.0
    %248 = vadd.xlane.f32.xlu0 %v247
    %v249 = vpop.xlane.xlu0 %248
    %vm250 = vcmp.eq.f32.partialorder %v84, 0.0
    %v253 = vlaneseq
    %v254 = vand.u32 %v253, 127
    %v255 = vlaneseq
    %v256 = vshrl.u32 %v255, 7
    %v257 = vsub.s32 %v254, %v256
    %v258 = vrot.slane %v246, %v257
    %v259 = vlaneseq
    %v260 = vshrl.u32 %v259, 7
    %v261 = vsub.s32 %v254, %v260
    %v262 = vrot.slane %v249, %v261
    %vm263 = vcmask 1041409
    %v264 = vsel %vm263, %v262, %v258
    %v266 = vsel %vm250, -1e+30, %v264
    %vm267 = vcmask 58368
    %v268 = vsel %vm267, %v266, -inf
    %269 = vmax.xlane.f32.xlu0 %v268
    %v270 = vpop.xlane.xlu0 %269
    %v271 = vsub.f32 %v266, %v270
    %v272 = vmul.f32 %v271, 1.442695
    %v273 = vpow.pop %v272
    %v274 = vsel %vm267, %v273, 0.0
    %275 = vadd.xlane.f32.xlu0 %v274
    %v276 = vpop.xlane.xlu0 %275
    %v277 = vrcp.pop %v276
    %v278 = vmul.f32 %v276, %v277
    %v279 = vsub.f32 2.0, %v278
    %v280 = vmul.f32 %v277, %v279
    %v281 = vmul.f32 %v273, %v280
    %282 = vst.msk [vmem:[#allocation11] sm:$0x3] %vm267, %v281
    %v283 = vlaneseq
    %v284 = vshrl.u32 %v283, 7
    %v285 = vsub.s32 0, %v284
    %v286 = vrot.slane %v281, %v285
    %288 = vbcast.lane.b32.xlu0 %v286, 256
    %v289 = vpop.permute.xlu0 %288
    %v290 = vlaneseq
    %v291 = vshrl.u32 %v290, 7
    %v292 = vsub.s32 1, %v291
    %v293 = vrot.slane %v281, %v292
    %295 = vbcast.lane.b32.xlu0 %v293, 256
    %v296 = vpop.permute.xlu0 %295
    %v297 = vmul.f32 %v289, %v82
    %v298 = vmul.f32 %v296, %v83
    %v299 = vsel %vm94, %v297, 0.0
    %v300 = vrot.slane %v299, 4
    %v301 = vadd.f32 %v299, %v300
    %v302 = vrot.slane %v301, 2
    %v303 = vadd.f32 %v301, %v302
    %v304 = vrot.slane %v303, 1
    %v305 = vadd.f32 %v303, %v304
    %v306 = vsel %vm94, %v298, 0.0
    %v307 = vrot.slane %v306, 4
    %v308 = vadd.f32 %v306, %v307
    %v309 = vrot.slane %v308, 2
    %v310 = vadd.f32 %v308, %v309
    %v311 = vrot.slane %v310, 1
    %v312 = vadd.f32 %v310, %v311
    %v315 = vsel %vm263, %v312, %v305
    %vm317 = vcmask 123904
    %318 = vst.msk [vmem:[#allocation10] sm:$0x3] %vm317, %v315
    // Predicated region
    $region42: #{tpu_custom_call.1} parent=1 // pred_check
      _
    $region43: #{tpu_custom_call.1} parent=1 // pred_check_branch
      %320 = sbr.rel (0) target = $region45
    $region44: #{tpu_custom_call.1} parent=1 // pred_region
      %s322 = ssub.s32 32, 32
      %323 = vsyncadd [#allocation4], %s322
      %s325 = sshll.u32 [#allocation10], 4
      %s326 = int_to_ptr.vmem [resolvable:$true] %s325
      %328 = dma.vmem_to_hbm [thread:$0]  %s326, 32, %s6, [#allocation4]
    $region45: #{tpu_custom_call.1} parent=1 // pred_fallthru
      _
    // Predicated region
    $region46: #{tpu_custom_call.1} parent=1 // pred_check
      _
    $region47: #{tpu_custom_call.1} parent=1 // pred_check_branch
      %330 = sbr.rel (0) target = $region49
    $region48: #{tpu_custom_call.1} parent=1 // pred_region
      %s332 = ssub.s32 32, 32
      %333 = vsyncadd [#allocation12], %s332
      %s335 = sshll.u32 [#allocation11], 4
      %s336 = int_to_ptr.vmem [resolvable:$true] %s335
      %338 = dma.vmem_to_hbm [thread:$0]  %s336, 32, %s7, [#allocation12]
    $region49: #{tpu_custom_call.1} parent=1 // pred_fallthru
      _
    // Predicated region
    $region50: #{tpu_custom_call.1} parent=1 // pred_check
      _
    $region51: #{tpu_custom_call.1} parent=1 // pred_check_branch
      %340 = sbr.rel (0) target = $region53
    $region52: #{tpu_custom_call.1} parent=1 // pred_region
      %341 = dma.done [#allocation4], 32
    $region53: #{tpu_custom_call.1} parent=1 // pred_fallthru
      _
    // Predicated region
    $region54: #{tpu_custom_call.1} parent=1 // pred_check
      _
    $region55: #{tpu_custom_call.1} parent=1 // pred_check_branch
      %343 = sbr.rel (0) target = $region57
    $region56: #{tpu_custom_call.1} parent=1 // pred_region
      %344 = dma.done [#allocation12], 32
    $region57: #{tpu_custom_call.1} parent=1 // pred_fallthru
      _
    %345 = vsyncpa [#allocation3], 1
    %346 = vsyncpa [#allocation6], 1
    %347 = vsyncpa [#allocation9], 1
    %348 = vsyncpa [#allocation4], 1
    %349 = vsyncpa [#allocation12], 1

</llo_original>
